<compile_context>
chip_gen: v7x
topology: tpu7x:2x2x1
jax: 0.10.0
libtpu: 0.0.40
codegen_flags: <defaults>
</compile_context>

<pallas_src>
from functools import partial

import jax
import jax.numpy as jnp
from jax.experimental import pallas as pl
from jax.experimental.pallas import tpu as pltpu


def _sam3a_kernel(f_ref, wk_ref, wq_ref, w_ref, out_ref, *, use_residual):
    # f_ref  : (BT, nf, D)   block of batch elements
    # wk_ref : (D, D)        K weight, torch Linear (out_features, in_features)
    # wq_ref : (D, D)        Q weight
    # w_ref  : (nf, nf, D)   field-pair interaction weights
    # out_ref: (BT, nf, D)
    bt, nf, d = f_ref.shape
    f = f_ref[...]                                              # (BT, nf, D)

    # K projection as a batched matmul: KF[b,n,e] = sum_d F[b,n,d] * Wk[e,d].
    wk_b = jnp.broadcast_to(wk_ref[...], (bt, d, d))            # (BT, D, D)
    kf = jnp.einsum("bnd,bed->bne", f, wk_b,
                    preferred_element_type=jnp.float32)         # (BT, nf, D)

    # Field-interaction matrix S = bmm(F, K(F)^T) on the MXU (no f.T transpose).
    s = jnp.einsum("bnd,bmd->bnm", f, kf,
                   preferred_element_type=jnp.float32)          # (BT, nf, nf)

    # out[b,n,d] = sum_m S[b,n,m] * W[n,m,d]  (VPU multiply + reduce over m).
    o = jnp.sum(s[:, :, :, None] * w_ref[...], axis=2)          # (BT, nf, D)

    if use_residual:
        wq_b = jnp.broadcast_to(wq_ref[...], (bt, d, d))
        o = o + jnp.einsum("bnd,bed->bne", f, wq_b,
                           preferred_element_type=jnp.float32)

    # TODO(synk): dropout (p=0 default) omitted; p>0 would use pltpu.prng_seed
    # + pltpu.stateful_bernoulli on `o` here.
    out_ref[...] = o.astype(out_ref.dtype)


def _pick_block_b(B, nf, D, vmem_budget_bytes=16 * 1024 * 1024):
    # Rough per-batch-element f32 footprint: f, kf, q-proj, out, S and the
    # (nf, nf, D) broadcast intermediate of the combine, plus double-buffered I/O.
    per_b = 4 * (4 * nf * D + nf * nf + nf * nf * D) + 8 * nf * D
    bb = max(1, vmem_budget_bytes // max(per_b, 1))
    # Cap so the batched-matmul unroll and VMEM stay modest on all generations
    # (v7x has only 64 MiB physical VMEM per TensorCore).
    return int(min(B, bb, 64))


def sam3a_forward(F, Wk, Wq, W, *, use_residual=True, block_b=None):
    """F: (B, nf, D); Wk, Wq: (D, D) torch Linear weights; W: (nf, nf, D)."""
    B, nf, D = F.shape
    assert W.shape == (nf, nf, D)
    assert Wk.shape == (D, D) and Wq.shape == (D, D)

    if block_b is None:
        block_b = _pick_block_b(B, nf, D)
    grid_b = pl.cdiv(B, block_b)

    flops = 2 * B * nf * D * D * (2 if use_residual else 1) + 4 * B * nf * nf * D
    bytes_accessed = 4 * (2 * B * nf * D + 2 * D * D + nf * nf * D)

    kernel = partial(_sam3a_kernel, use_residual=use_residual)

    return pl.pallas_call(
        kernel,
        out_shape=jax.ShapeDtypeStruct((B, nf, D), F.dtype),
        grid_spec=pltpu.PrefetchScalarGridSpec(
            num_scalar_prefetch=0,
            grid=(grid_b,),
            in_specs=[
                # batch block per grid step (trailing dims = full array dims)
                pl.BlockSpec((block_b, nf, D), lambda b: (b, 0, 0)),
                # parameters: constant index_map -> DMA'd once, reused each step
                pl.BlockSpec((D, D), lambda b: (0, 0)),
                pl.BlockSpec((D, D), lambda b: (0, 0)),
                pl.BlockSpec((nf, nf, D), lambda b: (0, 0, 0)),
            ],
            out_specs=pl.BlockSpec((block_b, nf, D), lambda b: (b, 0, 0)),
        ),
        compiler_params=pltpu.CompilerParams(
            dimension_semantics=("parallel",),
            vmem_limit_bytes=32 * 1024 * 1024,
        ),
        cost_estimate=pl.CostEstimate(
            flops=flops, transcendentals=0, bytes_accessed=bytes_accessed),
    )(F, Wk, Wq, W)


def sam3a_reference(F, Wk, Wq, W, use_residual=True):
    hi = jax.lax.Precision.HIGHEST
    KF = jnp.einsum("bnd,ed->bne", F, Wk, precision=hi)          # K(F) = F @ Wk^T
    S = jnp.einsum("bnd,bmd->bnm", F, KF, precision=hi)          # bmm(F, KF^T)
    out = jnp.sum(S[:, :, :, None] * W[None], axis=2)            # (S.unsq(-1)*W).sum(2)
    if use_residual:
        out = out + jnp.einsum("bnd,ed->bne", F, Wq, precision=hi)
    return out


if __name__ == "__main__":
    B, num_fields, embedding_dim = 2, 8, 16   # nf * D = 128

    key = jax.random.PRNGKey(0)
    kf_, kk_, kq_, kw_ = jax.random.split(key, 4)
    F = jax.random.normal(kf_, (B, num_fields, embedding_dim), dtype=jnp.float32)
    # nn.Linear(D, D, bias=False) weights, (out_features, in_features) layout.
    Wk = 0.1 * jax.random.normal(kk_, (embedding_dim, embedding_dim), dtype=jnp.float32)
    Wq = 0.1 * jax.random.normal(kq_, (embedding_dim, embedding_dim), dtype=jnp.float32)
    # nn.Parameter(torch.ones(nf, nf, D)) init, perturbed so the per-(n,m,d)
    # weighting is actually exercised by the correctness check.
    W = jnp.ones((num_fields, num_fields, embedding_dim), dtype=jnp.float32) + \
        0.1 * jax.random.normal(kw_, (num_fields, num_fields, embedding_dim),
                                dtype=jnp.float32)

    out = sam3a_forward(F, Wk, Wq, W, use_residual=True)
    out = jax.block_until_ready(out)

    ref = sam3a_reference(F, Wk, Wq, W, use_residual=True)
    assert out.shape == (B, num_fields, embedding_dim)
    max_err = float(jnp.max(jnp.abs(out - ref)))
    # Tolerance allows for reduced-precision MXU passes on f32 matmuls.
    assert jnp.allclose(out, ref, atol=1e-2, rtol=1e-2), max_err

    print("KERNEL_OK")
</pallas_src>

<mosaic_0001>
module attributes {stable_mosaic.version = 11 : i64} {
  func.func @_sam3a_kernel(%arg0: i32, %arg1: memref<2x8x16xf32, #tpu.memory_space<vmem>>, %arg2: memref<16x16xf32, #tpu.memory_space<vmem>>, %arg3: memref<16x16xf32, #tpu.memory_space<vmem>>, %arg4: memref<8x8x16xf32, #tpu.memory_space<vmem>>, %arg5: memref<2x8x16xf32, #tpu.memory_space<vmem>>) attributes {dimension_semantics = [#tpu.dimension_semantics<parallel>], iteration_bounds = array<i64: 1>, scalar_prefetch = 0 : i64, scratch_operands = 0 : i64, tpu.core_type = #tpu.core_type<tc>, window_params = [{transform_indices = @transform_0, window_bounds = array<i64: 2, 8, 16>}, {pipeline_mode = #tpu.pipeline_mode<synchronous>, transform_indices = @transform_1, window_bounds = array<i64: 16, 16>}, {pipeline_mode = #tpu.pipeline_mode<synchronous>, transform_indices = @transform_2, window_bounds = array<i64: 16, 16>}, {pipeline_mode = #tpu.pipeline_mode<synchronous>, transform_indices = @transform_3, window_bounds = array<i64: 8, 8, 16>}, {transform_indices = @transform_4, window_bounds = array<i64: 2, 8, 16>}]} {
    %c0 = arith.constant 0 : index
    %c0_0 = arith.constant 0 : index
    %c0_1 = arith.constant 0 : index
    %0 = vector.load %arg1[%c0, %c0_0, %c0_1] : memref<2x8x16xf32, #tpu.memory_space<vmem>>, vector<2x8x16xf32>
    %c0_2 = arith.constant 0 : index
    %c0_3 = arith.constant 0 : index
    %1 = vector.load %arg2[%c0_2, %c0_3] : memref<16x16xf32, #tpu.memory_space<vmem>>, vector<16x16xf32>
    %2 = vector.shape_cast %1 : vector<16x16xf32> to vector<1x16x16xf32>
    %3 = vector.broadcast %2 : vector<1x16x16xf32> to vector<2x16x16xf32>
    "tpu.trace_start"() <{level = 10 : i32, message = "bnd,bed->bne"}> : () -> ()
    %cst = arith.constant dense<0.000000e+00> : vector<2x8x16xf32>
    %4 = tpu.matmul %0, %3, %cst {dimension_numbers = #tpu.dot_dimension_numbers<[2], [2], [1], [1], [0, 0, 0, 1, 1, 1], [0], [0]>} : vector<2x8x16xf32>, vector<2x16x16xf32>, vector<2x8x16xf32> -> vector<2x8x16xf32>
    "tpu.trace_stop"() : () -> ()
    "tpu.trace_start"() <{level = 10 : i32, message = "bnd,bmd->bnm"}> : () -> ()
    %cst_4 = arith.constant dense<0.000000e+00> : vector<2x8x8xf32>
    %5 = tpu.matmul %0, %4, %cst_4 {dimension_numbers = #tpu.dot_dimension_numbers<[2], [2], [1], [1], [0, 0, 0, 1, 1, 1], [0], [0]>} : vector<2x8x16xf32>, vector<2x8x16xf32>, vector<2x8x8xf32> -> vector<2x8x8xf32>
    "tpu.trace_stop"() : () -> ()
    %6 = vector.shape_cast %5 : vector<2x8x8xf32> to vector<2x8x8x1xf32>
    %c0_5 = arith.constant 0 : index
    %c0_6 = arith.constant 0 : index
    %c0_7 = arith.constant 0 : index
    %7 = vector.load %arg4[%c0_5, %c0_6, %c0_7] : memref<8x8x16xf32, #tpu.memory_space<vmem>>, vector<8x8x16xf32>
    %8 = vector.shape_cast %7 : vector<8x8x16xf32> to vector<1x8x8x16xf32>
    %9 = vector.broadcast %6 : vector<2x8x8x1xf32> to vector<2x8x8x16xf32>
    %10 = vector.broadcast %8 : vector<1x8x8x16xf32> to vector<2x8x8x16xf32>
    %11 = arith.mulf %9, %10 : vector<2x8x8x16xf32>
    %cst_8 = arith.constant dense<0.000000e+00> : vector<2x8x16xf32>
    %12 = vector.multi_reduction <add>, %11, %cst_8 [2] : vector<2x8x8x16xf32> to vector<2x8x16xf32>
    %c0_9 = arith.constant 0 : index
    %c0_10 = arith.constant 0 : index
    %13 = vector.load %arg3[%c0_9, %c0_10] : memref<16x16xf32, #tpu.memory_space<vmem>>, vector<16x16xf32>
    %14 = vector.shape_cast %13 : vector<16x16xf32> to vector<1x16x16xf32>
    %15 = vector.broadcast %14 : vector<1x16x16xf32> to vector<2x16x16xf32>
    "tpu.trace_start"() <{level = 10 : i32, message = "bnd,bed->bne"}> : () -> ()
    %cst_11 = arith.constant dense<0.000000e+00> : vector<2x8x16xf32>
    %16 = tpu.matmul %0, %15, %cst_11 {dimension_numbers = #tpu.dot_dimension_numbers<[2], [2], [1], [1], [0, 0, 0, 1, 1, 1], [0], [0]>} : vector<2x8x16xf32>, vector<2x16x16xf32>, vector<2x8x16xf32> -> vector<2x8x16xf32>
    "tpu.trace_stop"() : () -> ()
    %17 = arith.addf %12, %16 : vector<2x8x16xf32>
    %c0_12 = arith.constant 0 : index
    %c0_13 = arith.constant 0 : index
    %c0_14 = arith.constant 0 : index
    %18 = vector.load %arg5[%c0_12, %c0_13, %c0_14] : memref<2x8x16xf32, #tpu.memory_space<vmem>>, vector<2x8x16xf32>
    tpu.vector_store %arg5[%c0_12, %c0_13, %c0_14], %17 {strides = array<i32>} : memref<2x8x16xf32, #tpu.memory_space<vmem>>, vector<2x8x16xf32>,
    return
  }
  func.func @transform_0(%arg0: i32) -> (i32, i32, i32) {
    %c0_i32 = arith.constant 0 : i32
    %c0_i32_0 = arith.constant 0 : i32
    %c0_i32_1 = arith.constant 0 : i32
    return %arg0, %c0_i32, %c0_i32_0 : i32, i32, i32
  }
  func.func @transform_1(%arg0: i32) -> (i32, i32) {
    %c0_i32 = arith.constant 0 : i32
    %c0_i32_0 = arith.constant 0 : i32
    %c0_i32_1 = arith.constant 0 : i32
    return %c0_i32, %c0_i32_0 : i32, i32
  }
  func.func @transform_2(%arg0: i32) -> (i32, i32) {
    %c0_i32 = arith.constant 0 : i32
    %c0_i32_0 = arith.constant 0 : i32
    %c0_i32_1 = arith.constant 0 : i32
    return %c0_i32, %c0_i32_0 : i32, i32
  }
  func.func @transform_3(%arg0: i32) -> (i32, i32, i32) {
    %c0_i32 = arith.constant 0 : i32
    %c0_i32_0 = arith.constant 0 : i32
    %c0_i32_1 = arith.constant 0 : i32
    %c0_i32_2 = arith.constant 0 : i32
    return %c0_i32, %c0_i32_0, %c0_i32_1 : i32, i32, i32
  }
  func.func @transform_4(%arg0: i32) -> (i32, i32, i32) {
    %c0_i32 = arith.constant 0 : i32
    %c0_i32_0 = arith.constant 0 : i32
    %c0_i32_1 = arith.constant 0 : i32
    return %arg0, %c0_i32, %c0_i32_0 : i32, i32, i32
  }
}

</mosaic_0001>

<llo_original>
// kernel: tpu_custom_call.1
$region0: #{tpu_custom_call.1}
  #allocation0 [shape = 'u32[]', space=smem, size = 0x4, offset = 0x4, fixed_abs, tag = 'smem constant byte address 0x4 - core index']
  #allocation1 [shape = 'u32[144,128]{1,0:T(1,128)}', space=vmem, size = 0x12000, scoped, tag = 'internal scratch']
  %s0 = inlined_call_operand.hbm [shape: f32[2,8,16], index: 0, kind: input, shape index: {}]
  %s1 = inlined_call_operand.hbm [shape: f32[16,16], index: 1, kind: input, shape index: {}]
  %s2 = inlined_call_operand.hbm [shape: f32[16,16], index: 2, kind: input, shape index: {}]
  %s3 = inlined_call_operand.hbm [shape: f32[8,8,16], index: 3, kind: input, shape index: {}]
  %s4 = inlined_call_operand.hbm [shape: f32[2,8,16], index: 4, kind: output, shape index: {}]
  %s5 = sld [smem:[#allocation0]]
  $region42: #{tpu_custom_call.1} parent=0
    _
  %s7 = ssub.s32 1, %s5
  %s8 = scalar_select 0, %s7, %s5
  $region1: #{tpu_custom_call.1} parent=0
    #allocation2 [shape = 'u8[8192]{0}', space=vmem, size = 0x2000, scoped, tag = 'input window, operand 0, single buffered']
    #allocation3 [shape = 's32[1]{0}', space=sflag, size = 0x4, scoped, tag = 'scoped memory for tpu_custom_call.1']
    #allocation4 [shape = 's32[1]{0}', space=sflag, size = 0x4, scoped, tag = 'scoped memory for tpu_custom_call.1']
    #allocation5 [shape = 'u8[8192]{0}', space=vmem, size = 0x2000, scoped, tag = 'input window, operand 1, single buffered']
    #allocation6 [shape = 's32[1]{0}', space=sflag, size = 0x4, scoped, tag = 'scoped memory for tpu_custom_call.1']
    #allocation7 [shape = 'u8[8192]{0}', space=vmem, size = 0x2000, scoped, tag = 'input window, operand 2, single buffered']
    #allocation8 [shape = 'u8[32768]{0}', space=vmem, size = 0x8000, scoped, tag = 'input window, operand 3, single buffered']
    #allocation9 [shape = 's32[1]{0}', space=sflag, size = 0x4, scoped, tag = 'scoped memory for tpu_custom_call.1']
    #allocation10 [shape = 'u8[8192]{0}', space=vmem, size = 0x2000, scoped, tag = 'output window, operand 0, single buffered']
    %9 = vsyncpa [#allocation3], 0
    %10 = vsyncpa [#allocation6], 0
    %11 = vsyncpa [#allocation9], 0
    %12 = vsyncpa [#allocation4], 0
    // Predicated region
    $region2: #{tpu_custom_call.1} parent=1 // pred_check
      _
    $region3: #{tpu_custom_call.1} parent=1 // pred_check_branch
      %14 = sbr.rel (0) target = $region5
    $region4: #{tpu_custom_call.1} parent=1 // pred_region
      %s16 = ssub.s32 256, 256
      %17 = vsyncadd [#allocation3], %s16
      %s18 = sshll.u32 [#allocation2], 4
      %s19 = int_to_ptr.vmem [resolvable:$true] %s18
      %24 = dma.hbm_to_vmem [thread:$0]  %s0, 256, %s19, [#allocation3], 128, 128, 8
    $region5: #{tpu_custom_call.1} parent=1 // pred_fallthru
      _
    // Predicated region
    $region6: #{tpu_custom_call.1} parent=1 // pred_check
      _
    $region7: #{tpu_custom_call.1} parent=1 // pred_check_branch
      %26 = sbr.rel (0) target = $region9
    $region8: #{tpu_custom_call.1} parent=1 // pred_region
      %s28 = ssub.s32 256, 256
      %29 = vsyncadd [#allocation6], %s28
      %s30 = sshll.u32 [#allocation5], 4
      %s31 = int_to_ptr.vmem [resolvable:$true] %s30
      %36 = dma.hbm_to_vmem [thread:$0]  %s1, 256, %s31, [#allocation6], 128, 128, 8
    $region9: #{tpu_custom_call.1} parent=1 // pred_fallthru
      _
    // Predicated region
    $region10: #{tpu_custom_call.1} parent=1 // pred_check
      _
    $region11: #{tpu_custom_call.1} parent=1 // pred_check_branch
      %38 = sbr.rel (0) target = $region13
    $region12: #{tpu_custom_call.1} parent=1 // pred_region
      %s40 = ssub.s32 256, 256
      %41 = vsyncadd [#allocation6], %s40
      %s42 = sshll.u32 [#allocation7], 4
      %s43 = int_to_ptr.vmem [resolvable:$true] %s42
      %48 = dma.hbm_to_vmem [thread:$0]  %s2, 256, %s43, [#allocation6], 128, 128, 8
    $region13: #{tpu_custom_call.1} parent=1 // pred_fallthru
      _
    // Predicated region
    $region14: #{tpu_custom_call.1} parent=1 // pred_check
      _
    $region15: #{tpu_custom_call.1} parent=1 // pred_check_branch
      %50 = sbr.rel (0) target = $region17
    $region16: #{tpu_custom_call.1} parent=1 // pred_region
      %s52 = ssub.s32 1024, 1024
      %53 = vsyncadd [#allocation9], %s52
      %s54 = sshll.u32 [#allocation8], 4
      %s55 = int_to_ptr.vmem [resolvable:$true] %s54
      %60 = dma.hbm_to_vmem [thread:$0]  %s3, 1024, %s55, [#allocation9], 128, 128, 8
    $region17: #{tpu_custom_call.1} parent=1 // pred_fallthru
      _
    // Predicated region
    $region18: #{tpu_custom_call.1} parent=1 // pred_check
      _
    $region19: #{tpu_custom_call.1} parent=1 // pred_check_branch
      %62 = sbr.rel (0) target = $region21
    $region20: #{tpu_custom_call.1} parent=1 // pred_region
      %63 = dma.done [#allocation3], 256
    $region21: #{tpu_custom_call.1} parent=1 // pred_fallthru
      _
    // Predicated region
    $region22: #{tpu_custom_call.1} parent=1 // pred_check
      _
    $region23: #{tpu_custom_call.1} parent=1 // pred_check_branch
      %65 = sbr.rel (0) target = $region25
    $region24: #{tpu_custom_call.1} parent=1 // pred_region
      %66 = dma.done [#allocation6], 256
    $region25: #{tpu_custom_call.1} parent=1 // pred_fallthru
      _
    // Predicated region
    $region26: #{tpu_custom_call.1} parent=1 // pred_check
      _
    $region27: #{tpu_custom_call.1} parent=1 // pred_check_branch
      %68 = sbr.rel (0) target = $region29
    $region28: #{tpu_custom_call.1} parent=1 // pred_region
      %69 = dma.done [#allocation6], 256
    $region29: #{tpu_custom_call.1} parent=1 // pred_fallthru
      _
    // Predicated region
    $region30: #{tpu_custom_call.1} parent=1 // pred_check
      _
    $region31: #{tpu_custom_call.1} parent=1 // pred_check_branch
      %71 = sbr.rel (0) target = $region33
    $region32: #{tpu_custom_call.1} parent=1 // pred_region
      %72 = dma.done [#allocation9], 1024
    $region33: #{tpu_custom_call.1} parent=1 // pred_fallthru
      _
    %v73 = vld [vmem:[#allocation2] sm:$0xff]
    %v74 = vld [vmem:[#allocation2 + $0x8] sm:$0xff]
    %v75 = vld [vmem:[#allocation5] sm:$0xff]
    %v76 = vld [vmem:[#allocation5 + $0x8] sm:$0xff]
    %vm77 = vcmask 130048
    %v79 = vsel %vm77, %v73, 0
    %v82 = vsel %vm77, %v75, 0
    %v85 = vsel %vm77, %v76, 0
    %87 = vmatprep.subr.mxu0 0.0
    %88 = vmatpush1.xpose.msra.mxu0 %v82
    %89 = vmatprep.subr.mxu0 0.0
    %90 = vmatpush1.xpose.msra.mxu0 %v85
    %91 = vmatprep.subr.mxu0 0.0
    %92 = vmatpush1.xpose.msra.mxu0 0.0
    %93 = vmatprep.subr.mxu0 0.0
    %94 = vmatpush1.xpose.msra.mxu0 0.0
    %95 = vmatprep.subr.mxu0 0.0
    %96 = vmatpush1.xpose.msra.mxu0 0.0
    %97 = vmatprep.subr.mxu0 0.0
    %98 = vmatpush1.xpose.msra.mxu0 0.0
    %99 = vmatprep.subr.mxu0 0.0
    %100 = vmatpush1.xpose.msra.mxu0 0.0
    %101 = vmatprep.subr.mxu0 0.0
    %102 = vmatpush1.xpose.msra.mxu0 0.0
    %103 = vmatprep.subr.mxu0 0.0
    %104 = vmatpush1.xpose.msra.mxu0 0.0
    %105 = vmatprep.subr.mxu0 0.0
    %106 = vmatpush1.xpose.msra.mxu0 0.0
    %107 = vmatprep.subr.mxu0 0.0
    %108 = vmatpush1.xpose.msra.mxu0 0.0
    %109 = vmatprep.subr.mxu0 0.0
    %110 = vmatpush1.xpose.msra.mxu0 0.0
    %111 = vmatprep.subr.mxu0 0.0
    %112 = vmatpush1.xpose.msra.mxu0 0.0
    %113 = vmatprep.subr.mxu0 0.0
    %114 = vmatpush1.xpose.msra.mxu0 0.0
    %115 = vmatprep.subr.mxu0 0.0
    %116 = vmatpush1.xpose.msra.mxu0 0.0
    %117 = vmatprep.subr.mxu0 0.0
    %118 = vmatpush1.xpose.msra.mxu0 0.0
    %119 = vmatprep.subr.mxu0 0.0
    %120 = vmatpush1.xpose.msra.mxu0 0.0
    %121 = vmatprep.subr.mxu0 0.0
    %122 = vmatpush1.xpose.msra.mxu0 0.0
    %123 = vmatprep.subr.mxu0 0.0
    %124 = vmatpush1.xpose.msra.mxu0 0.0
    %125 = vmatprep.subr.mxu0 0.0
    %126 = vmatpush1.xpose.msra.mxu0 0.0
    %127 = vmatprep.subr.mxu0 0.0
    %128 = vmatpush1.xpose.msra.mxu0 0.0
    %129 = vmatprep.subr.mxu0 0.0
    %130 = vmatpush1.xpose.msra.mxu0 0.0
    %131 = vmatprep.subr.mxu0 0.0
    %132 = vmatpush1.xpose.msra.mxu0 0.0
    %133 = vmatprep.subr.mxu0 0.0
    %134 = vmatpush1.xpose.msra.mxu0 0.0
    %135 = vmatprep.subr.mxu0 0.0
    %136 = vmatpush1.xpose.msra.mxu0 0.0
    %137 = vmatprep.subr.mxu0 0.0
    %138 = vmatpush1.xpose.msra.mxu0 0.0
    %139 = vmatprep.subr.mxu0 0.0
    %140 = vmatpush1.xpose.msra.mxu0 0.0
    %141 = vmatprep.subr.mxu0 0.0
    %142 = vmatpush1.xpose.msra.mxu0 0.0
    %143 = vmatprep.subr.mxu0 0.0
    %144 = vmatpush1.xpose.msra.mxu0 0.0
    %145 = vmatprep.subr.mxu0 0.0
    %146 = vmatpush1.xpose.msra.mxu0 0.0
    %147 = vmatprep.subr.mxu0 0.0
    %148 = vmatpush1.xpose.msra.mxu0 0.0
    %149 = vmatprep.subr.mxu0 0.0
    %150 = vmatpush1.xpose.msra.mxu0 0.0
    %151 = vmatprep.mubr.f32.mxu0 0.0
    %152 = vmatmul.mubr.f32.gmra.mrb[0].mxu0 %v79
    %v153 = vpop.f32.mrb[0].mxu0
    %v154 = vadd.f32 0.0, %v153
    %v155 = vpop.f32.mrb[0].mxu0
    %156 = vdwg.mxu0
    %v158 = vsel %vm77, %v74, 0
    %160 = vmatprep.subr.mxu0 0.0
    %161 = vmatpush1.xpose.msra.mxu0 %v82
    %162 = vmatprep.subr.mxu0 0.0
    %163 = vmatpush1.xpose.msra.mxu0 %v85
    %164 = vmatprep.subr.mxu0 0.0
    %165 = vmatpush1.xpose.msra.mxu0 0.0
    %166 = vmatprep.subr.mxu0 0.0
    %167 = vmatpush1.xpose.msra.mxu0 0.0
    %168 = vmatprep.subr.mxu0 0.0
    %169 = vmatpush1.xpose.msra.mxu0 0.0
    %170 = vmatprep.subr.mxu0 0.0
    %171 = vmatpush1.xpose.msra.mxu0 0.0
    %172 = vmatprep.subr.mxu0 0.0
    %173 = vmatpush1.xpose.msra.mxu0 0.0
    %174 = vmatprep.subr.mxu0 0.0
    %175 = vmatpush1.xpose.msra.mxu0 0.0
    %176 = vmatprep.subr.mxu0 0.0
    %177 = vmatpush1.xpose.msra.mxu0 0.0
    %178 = vmatprep.subr.mxu0 0.0
    %179 = vmatpush1.xpose.msra.mxu0 0.0
    %180 = vmatprep.subr.mxu0 0.0
    %181 = vmatpush1.xpose.msra.mxu0 0.0
    %182 = vmatprep.subr.mxu0 0.0
    %183 = vmatpush1.xpose.msra.mxu0 0.0
    %184 = vmatprep.subr.mxu0 0.0
    %185 = vmatpush1.xpose.msra.mxu0 0.0
    %186 = vmatprep.subr.mxu0 0.0
    %187 = vmatpush1.xpose.msra.mxu0 0.0
    %188 = vmatprep.subr.mxu0 0.0
    %189 = vmatpush1.xpose.msra.mxu0 0.0
    %190 = vmatprep.subr.mxu0 0.0
    %191 = vmatpush1.xpose.msra.mxu0 0.0
    %192 = vmatprep.subr.mxu0 0.0
    %193 = vmatpush1.xpose.msra.mxu0 0.0
    %194 = vmatprep.subr.mxu0 0.0
    %195 = vmatpush1.xpose.msra.mxu0 0.0
    %196 = vmatprep.subr.mxu0 0.0
    %197 = vmatpush1.xpose.msra.mxu0 0.0
    %198 = vmatprep.subr.mxu0 0.0
    %199 = vmatpush1.xpose.msra.mxu0 0.0
    %200 = vmatprep.subr.mxu0 0.0
    %201 = vmatpush1.xpose.msra.mxu0 0.0
    %202 = vmatprep.subr.mxu0 0.0
    %203 = vmatpush1.xpose.msra.mxu0 0.0
    %204 = vmatprep.subr.mxu0 0.0
    %205 = vmatpush1.xpose.msra.mxu0 0.0
    %206 = vmatprep.subr.mxu0 0.0
    %207 = vmatpush1.xpose.msra.mxu0 0.0
    %208 = vmatprep.subr.mxu0 0.0
    %209 = vmatpush1.xpose.msra.mxu0 0.0
    %210 = vmatprep.subr.mxu0 0.0
    %211 = vmatpush1.xpose.msra.mxu0 0.0
    %212 = vmatprep.subr.mxu0 0.0
    %213 = vmatpush1.xpose.msra.mxu0 0.0
    %214 = vmatprep.subr.mxu0 0.0
    %215 = vmatpush1.xpose.msra.mxu0 0.0
    %216 = vmatprep.subr.mxu0 0.0
    %217 = vmatpush1.xpose.msra.mxu0 0.0
    %218 = vmatprep.subr.mxu0 0.0
    %219 = vmatpush1.xpose.msra.mxu0 0.0
    %220 = vmatprep.subr.mxu0 0.0
    %221 = vmatpush1.xpose.msra.mxu0 0.0
    %222 = vmatprep.subr.mxu0 0.0
    %223 = vmatpush1.xpose.msra.mxu0 0.0
    %224 = vmatprep.mubr.f32.mxu0 0.0
    %225 = vmatmul.mubr.f32.gmra.mrb[0].mxu0 %v158
    %v226 = vpop.f32.mrb[0].mxu0
    %v227 = vadd.f32 0.0, %v226
    %v228 = vpop.f32.mrb[0].mxu0
    %229 = vdwg.mxu0
    %v231 = vsel %vm77, %v154, 0
    %233 = vmatprep.subr.mxu0 0.0
    %234 = vmatpush1.xpose.msra.mxu0 %v231
    %235 = vmatprep.subr.mxu0 0.0
    %236 = vmatpush1.xpose.msra.mxu0 0.0
    %237 = vmatprep.subr.mxu0 0.0
    %238 = vmatpush1.xpose.msra.mxu0 0.0
    %239 = vmatprep.subr.mxu0 0.0
    %240 = vmatpush1.xpose.msra.mxu0 0.0
    %241 = vmatprep.subr.mxu0 0.0
    %242 = vmatpush1.xpose.msra.mxu0 0.0
    %243 = vmatprep.subr.mxu0 0.0
    %244 = vmatpush1.xpose.msra.mxu0 0.0
    %245 = vmatprep.subr.mxu0 0.0
    %246 = vmatpush1.xpose.msra.mxu0 0.0
    %247 = vmatprep.subr.mxu0 0.0
    %248 = vmatpush1.xpose.msra.mxu0 0.0
    %249 = vmatprep.subr.mxu0 0.0
    %250 = vmatpush1.xpose.msra.mxu0 0.0
    %251 = vmatprep.subr.mxu0 0.0
    %252 = vmatpush1.xpose.msra.mxu0 0.0
    %253 = vmatprep.subr.mxu0 0.0
    %254 = vmatpush1.xpose.msra.mxu0 0.0
    %255 = vmatprep.subr.mxu0 0.0
    %256 = vmatpush1.xpose.msra.mxu0 0.0
    %257 = vmatprep.subr.mxu0 0.0
    %258 = vmatpush1.xpose.msra.mxu0 0.0
    %259 = vmatprep.subr.mxu0 0.0
    %260 = vmatpush1.xpose.msra.mxu0 0.0
    %261 = vmatprep.subr.mxu0 0.0
    %262 = vmatpush1.xpose.msra.mxu0 0.0
    %263 = vmatprep.subr.mxu0 0.0
    %264 = vmatpush1.xpose.msra.mxu0 0.0
    %265 = vmatprep.subr.mxu0 0.0
    %266 = vmatpush1.xpose.msra.mxu0 0.0
    %267 = vmatprep.subr.mxu0 0.0
    %268 = vmatpush1.xpose.msra.mxu0 0.0
    %269 = vmatprep.subr.mxu0 0.0
    %270 = vmatpush1.xpose.msra.mxu0 0.0
    %271 = vmatprep.subr.mxu0 0.0
    %272 = vmatpush1.xpose.msra.mxu0 0.0
    %273 = vmatprep.subr.mxu0 0.0
    %274 = vmatpush1.xpose.msra.mxu0 0.0
    %275 = vmatprep.subr.mxu0 0.0
    %276 = vmatpush1.xpose.msra.mxu0 0.0
    %277 = vmatprep.subr.mxu0 0.0
    %278 = vmatpush1.xpose.msra.mxu0 0.0
    %279 = vmatprep.subr.mxu0 0.0
    %280 = vmatpush1.xpose.msra.mxu0 0.0
    %281 = vmatprep.subr.mxu0 0.0
    %282 = vmatpush1.xpose.msra.mxu0 0.0
    %283 = vmatprep.subr.mxu0 0.0
    %284 = vmatpush1.xpose.msra.mxu0 0.0
    %285 = vmatprep.subr.mxu0 0.0
    %286 = vmatpush1.xpose.msra.mxu0 0.0
    %287 = vmatprep.subr.mxu0 0.0
    %288 = vmatpush1.xpose.msra.mxu0 0.0
    %289 = vmatprep.subr.mxu0 0.0
    %290 = vmatpush1.xpose.msra.mxu0 0.0
    %291 = vmatprep.subr.mxu0 0.0
    %292 = vmatpush1.xpose.msra.mxu0 0.0
    %293 = vmatprep.subr.mxu0 0.0
    %294 = vmatpush1.xpose.msra.mxu0 0.0
    %295 = vmatprep.subr.mxu0 0.0
    %296 = vmatpush1.xpose.msra.mxu0 0.0
    %297 = vmatprep.mubr.f32.mxu0 0.0
    %298 = vmatmul.mubr.f32.gmra.mrb[0].mxu0 %v79
    %v299 = vpop.f32.mrb[0].mxu0
    %v300 = vadd.f32 0.0, %v299
    %v301 = vpop.f32.mrb[0].mxu0
    %302 = vdwg.mxu0
    %v304 = vsel %vm77, %v227, 0
    %306 = vmatprep.subr.mxu0 0.0
    %307 = vmatpush1.xpose.msra.mxu0 %v304
    %308 = vmatprep.subr.mxu0 0.0
    %309 = vmatpush1.xpose.msra.mxu0 0.0
    %310 = vmatprep.subr.mxu0 0.0
    %311 = vmatpush1.xpose.msra.mxu0 0.0
    %312 = vmatprep.subr.mxu0 0.0
    %313 = vmatpush1.xpose.msra.mxu0 0.0
    %314 = vmatprep.subr.mxu0 0.0
    %315 = vmatpush1.xpose.msra.mxu0 0.0
    %316 = vmatprep.subr.mxu0 0.0
    %317 = vmatpush1.xpose.msra.mxu0 0.0
    %318 = vmatprep.subr.mxu0 0.0
    %319 = vmatpush1.xpose.msra.mxu0 0.0
    %320 = vmatprep.subr.mxu0 0.0
    %321 = vmatpush1.xpose.msra.mxu0 0.0
    %322 = vmatprep.subr.mxu0 0.0
    %323 = vmatpush1.xpose.msra.mxu0 0.0
    %324 = vmatprep.subr.mxu0 0.0
    %325 = vmatpush1.xpose.msra.mxu0 0.0
    %326 = vmatprep.subr.mxu0 0.0
    %327 = vmatpush1.xpose.msra.mxu0 0.0
    %328 = vmatprep.subr.mxu0 0.0
    %329 = vmatpush1.xpose.msra.mxu0 0.0
    %330 = vmatprep.subr.mxu0 0.0
    %331 = vmatpush1.xpose.msra.mxu0 0.0
    %332 = vmatprep.subr.mxu0 0.0
    %333 = vmatpush1.xpose.msra.mxu0 0.0
    %334 = vmatprep.subr.mxu0 0.0
    %335 = vmatpush1.xpose.msra.mxu0 0.0
    %336 = vmatprep.subr.mxu0 0.0
    %337 = vmatpush1.xpose.msra.mxu0 0.0
    %338 = vmatprep.subr.mxu0 0.0
    %339 = vmatpush1.xpose.msra.mxu0 0.0
    %340 = vmatprep.subr.mxu0 0.0
    %341 = vmatpush1.xpose.msra.mxu0 0.0
    %342 = vmatprep.subr.mxu0 0.0
    %343 = vmatpush1.xpose.msra.mxu0 0.0
    %344 = vmatprep.subr.mxu0 0.0
    %345 = vmatpush1.xpose.msra.mxu0 0.0
    %346 = vmatprep.subr.mxu0 0.0
    %347 = vmatpush1.xpose.msra.mxu0 0.0
    %348 = vmatprep.subr.mxu0 0.0
    %349 = vmatpush1.xpose.msra.mxu0 0.0
    %350 = vmatprep.subr.mxu0 0.0
    %351 = vmatpush1.xpose.msra.mxu0 0.0
    %352 = vmatprep.subr.mxu0 0.0
    %353 = vmatpush1.xpose.msra.mxu0 0.0
    %354 = vmatprep.subr.mxu0 0.0
    %355 = vmatpush1.xpose.msra.mxu0 0.0
    %356 = vmatprep.subr.mxu0 0.0
    %357 = vmatpush1.xpose.msra.mxu0 0.0
    %358 = vmatprep.subr.mxu0 0.0
    %359 = vmatpush1.xpose.msra.mxu0 0.0
    %360 = vmatprep.subr.mxu0 0.0
    %361 = vmatpush1.xpose.msra.mxu0 0.0
    %362 = vmatprep.subr.mxu0 0.0
    %363 = vmatpush1.xpose.msra.mxu0 0.0
    %364 = vmatprep.subr.mxu0 0.0
    %365 = vmatpush1.xpose.msra.mxu0 0.0
    %366 = vmatprep.subr.mxu0 0.0
    %367 = vmatpush1.xpose.msra.mxu0 0.0
    %368 = vmatprep.subr.mxu0 0.0
    %369 = vmatpush1.xpose.msra.mxu0 0.0
    %370 = vmatprep.mubr.f32.mxu0 0.0
    %371 = vmatmul.mubr.f32.gmra.mrb[0].mxu0 %v158
    %v372 = vpop.f32.mrb[0].mxu0
    %v373 = vadd.f32 0.0, %v372
    %v374 = vpop.f32.mrb[0].mxu0
    %375 = vdwg.mxu0
    %v376 = vlaneseq
    %v377 = vshrl.u32 %v376, 7
    %v378 = vsub.s32 0, %v377
    %v379 = vrot.slane %v300, %v378
    %381 = vbcast.lane.b32.xlu0 %v379, 256
    %v382 = vpop.permute.xlu0 %381
    %v383 = vlaneseq
    %v384 = vshrl.u32 %v383, 7
    %v385 = vsub.s32 1, %v384
    %v386 = vrot.slane %v300, %v385
    %388 = vbcast.lane.b32.xlu0 %v386, 256
    %v389 = vpop.permute.xlu0 %388
    %v390 = vlaneseq
    %v391 = vshrl.u32 %v390, 7
    %v392 = vsub.s32 2, %v391
    %v393 = vrot.slane %v300, %v392
    %395 = vbcast.lane.b32.xlu0 %v393, 256
    %v396 = vpop.permute.xlu0 %395
    %v397 = vlaneseq
    %v398 = vshrl.u32 %v397, 7
    %v399 = vsub.s32 3, %v398
    %v400 = vrot.slane %v300, %v399
    %402 = vbcast.lane.b32.xlu0 %v400, 256
    %v403 = vpop.permute.xlu0 %402
    %v404 = vlaneseq
    %v405 = vshrl.u32 %v404, 7
    %v406 = vsub.s32 4, %v405
    %v407 = vrot.slane %v300, %v406
    %409 = vbcast.lane.b32.xlu0 %v407, 256
    %v410 = vpop.permute.xlu0 %409
    %v411 = vlaneseq
    %v412 = vshrl.u32 %v411, 7
    %v413 = vsub.s32 5, %v412
    %v414 = vrot.slane %v300, %v413
    %416 = vbcast.lane.b32.xlu0 %v414, 256
    %v417 = vpop.permute.xlu0 %416
    %v418 = vlaneseq
    %v419 = vshrl.u32 %v418, 7
    %v420 = vsub.s32 6, %v419
    %v421 = vrot.slane %v300, %v420
    %423 = vbcast.lane.b32.xlu0 %v421, 256
    %v424 = vpop.permute.xlu0 %423
    %v425 = vlaneseq
    %v426 = vshrl.u32 %v425, 7
    %v427 = vsub.s32 7, %v426
    %v428 = vrot.slane %v300, %v427
    %430 = vbcast.lane.b32.xlu0 %v428, 256
    %v431 = vpop.permute.xlu0 %430
    %v432 = vlaneseq
    %v433 = vshrl.u32 %v432, 7
    %v434 = vsub.s32 0, %v433
    %v435 = vrot.slane %v373, %v434
    %437 = vbcast.lane.b32.xlu0 %v435, 256
    %v438 = vpop.permute.xlu0 %437
    %v439 = vlaneseq
    %v440 = vshrl.u32 %v439, 7
    %v441 = vsub.s32 1, %v440
    %v442 = vrot.slane %v373, %v441
    %444 = vbcast.lane.b32.xlu0 %v442, 256
    %v445 = vpop.permute.xlu0 %444
    %v446 = vlaneseq
    %v447 = vshrl.u32 %v446, 7
    %v448 = vsub.s32 2, %v447
    %v449 = vrot.slane %v373, %v448
    %451 = vbcast.lane.b32.xlu0 %v449, 256
    %v452 = vpop.permute.xlu0 %451
    %v453 = vlaneseq
    %v454 = vshrl.u32 %v453, 7
    %v455 = vsub.s32 3, %v454
    %v456 = vrot.slane %v373, %v455
    %458 = vbcast.lane.b32.xlu0 %v456, 256
    %v459 = vpop.permute.xlu0 %458
    %v460 = vlaneseq
    %v461 = vshrl.u32 %v460, 7
    %v462 = vsub.s32 4, %v461
    %v463 = vrot.slane %v373, %v462
    %465 = vbcast.lane.b32.xlu0 %v463, 256
    %v466 = vpop.permute.xlu0 %465
    %v467 = vlaneseq
    %v468 = vshrl.u32 %v467, 7
    %v469 = vsub.s32 5, %v468
    %v470 = vrot.slane %v373, %v469
    %472 = vbcast.lane.b32.xlu0 %v470, 256
    %v473 = vpop.permute.xlu0 %472
    %v474 = vlaneseq
    %v475 = vshrl.u32 %v474, 7
    %v476 = vsub.s32 6, %v475
    %v477 = vrot.slane %v373, %v476
    %479 = vbcast.lane.b32.xlu0 %v477, 256
    %v480 = vpop.permute.xlu0 %479
    %v481 = vlaneseq
    %v482 = vshrl.u32 %v481, 7
    %v483 = vsub.s32 7, %v482
    %v484 = vrot.slane %v373, %v483
    %486 = vbcast.lane.b32.xlu0 %v484, 256
    %v487 = vpop.permute.xlu0 %486
    %v488 = vld [vmem:[#allocation8] sm:$0xff]
    %v489 = vld [vmem:[#allocation8 + $0x8] sm:$0xff]
    %v490 = vld [vmem:[#allocation8 + $0x10] sm:$0xff]
    %v491 = vld [vmem:[#allocation8 + $0x18] sm:$0xff]
    %v492 = vld [vmem:[#allocation8 + $0x20] sm:$0xff]
    %v493 = vld [vmem:[#allocation8 + $0x28] sm:$0xff]
    %v494 = vld [vmem:[#allocation8 + $0x30] sm:$0xff]
    %v495 = vld [vmem:[#allocation8 + $0x38] sm:$0xff]
    %v496 = vmul.f32 %v382, %v488
    %v497 = vmul.f32 %v389, %v489
    %v498 = vmul.f32 %v396, %v490
    %v499 = vmul.f32 %v403, %v491
    %v500 = vmul.f32 %v410, %v492
    %v501 = vmul.f32 %v417, %v493
    %v502 = vmul.f32 %v424, %v494
    %v503 = vmul.f32 %v431, %v495
    %v504 = vmul.f32 %v438, %v488
    %v505 = vmul.f32 %v445, %v489
    %v506 = vmul.f32 %v452, %v490
    %v507 = vmul.f32 %v459, %v491
    %v508 = vmul.f32 %v466, %v492
    %v509 = vmul.f32 %v473, %v493
    %v510 = vmul.f32 %v480, %v494
    %v511 = vmul.f32 %v487, %v495
    %v512 = vsel %vm77, %v496, 0.0
    %v513 = vrot.slane %v512, 4
    %v514 = vadd.f32 %v512, %v513
    %v515 = vrot.slane %v514, 2
    %v516 = vadd.f32 %v514, %v515
    %v517 = vrot.slane %v516, 1
    %v518 = vadd.f32 %v516, %v517
    %v519 = vsel %vm77, %v497, 0.0
    %v520 = vrot.slane %v519, 4
    %v521 = vadd.f32 %v519, %v520
    %v522 = vrot.slane %v521, 2
    %v523 = vadd.f32 %v521, %v522
    %v524 = vrot.slane %v523, 1
    %v525 = vadd.f32 %v523, %v524
    %v526 = vsel %vm77, %v498, 0.0
    %v527 = vrot.slane %v526, 4
    %v528 = vadd.f32 %v526, %v527
    %v529 = vrot.slane %v528, 2
    %v530 = vadd.f32 %v528, %v529
    %v531 = vrot.slane %v530, 1
    %v532 = vadd.f32 %v530, %v531
    %v533 = vsel %vm77, %v499, 0.0
    %v534 = vrot.slane %v533, 4
    %v535 = vadd.f32 %v533, %v534
    %v536 = vrot.slane %v535, 2
    %v537 = vadd.f32 %v535, %v536
    %v538 = vrot.slane %v537, 1
    %v539 = vadd.f32 %v537, %v538
    %v540 = vsel %vm77, %v500, 0.0
    %v541 = vrot.slane %v540, 4
    %v542 = vadd.f32 %v540, %v541
    %v543 = vrot.slane %v542, 2
    %v544 = vadd.f32 %v542, %v543
    %v545 = vrot.slane %v544, 1
    %v546 = vadd.f32 %v544, %v545
    %v547 = vsel %vm77, %v501, 0.0
    %v548 = vrot.slane %v547, 4
    %v549 = vadd.f32 %v547, %v548
    %v550 = vrot.slane %v549, 2
    %v551 = vadd.f32 %v549, %v550
    %v552 = vrot.slane %v551, 1
    %v553 = vadd.f32 %v551, %v552
    %v554 = vsel %vm77, %v502, 0.0
    %v555 = vrot.slane %v554, 4
    %v556 = vadd.f32 %v554, %v555
    %v557 = vrot.slane %v556, 2
    %v558 = vadd.f32 %v556, %v557
    %v559 = vrot.slane %v558, 1
    %v560 = vadd.f32 %v558, %v559
    %v561 = vsel %vm77, %v503, 0.0
    %v562 = vrot.slane %v561, 4
    %v563 = vadd.f32 %v561, %v562
    %v564 = vrot.slane %v563, 2
    %v565 = vadd.f32 %v563, %v564
    %v566 = vrot.slane %v565, 1
    %v567 = vadd.f32 %v565, %v566
    %v568 = vsel %vm77, %v504, 0.0
    %v569 = vrot.slane %v568, 4
    %v570 = vadd.f32 %v568, %v569
    %v571 = vrot.slane %v570, 2
    %v572 = vadd.f32 %v570, %v571
    %v573 = vrot.slane %v572, 1
    %v574 = vadd.f32 %v572, %v573
    %v575 = vsel %vm77, %v505, 0.0
    %v576 = vrot.slane %v575, 4
    %v577 = vadd.f32 %v575, %v576
    %v578 = vrot.slane %v577, 2
    %v579 = vadd.f32 %v577, %v578
    %v580 = vrot.slane %v579, 1
    %v581 = vadd.f32 %v579, %v580
    %v582 = vsel %vm77, %v506, 0.0
    %v583 = vrot.slane %v582, 4
    %v584 = vadd.f32 %v582, %v583
    %v585 = vrot.slane %v584, 2
    %v586 = vadd.f32 %v584, %v585
    %v587 = vrot.slane %v586, 1
    %v588 = vadd.f32 %v586, %v587
    %v589 = vsel %vm77, %v507, 0.0
    %v590 = vrot.slane %v589, 4
    %v591 = vadd.f32 %v589, %v590
    %v592 = vrot.slane %v591, 2
    %v593 = vadd.f32 %v591, %v592
    %v594 = vrot.slane %v593, 1
    %v595 = vadd.f32 %v593, %v594
    %v596 = vsel %vm77, %v508, 0.0
    %v597 = vrot.slane %v596, 4
    %v598 = vadd.f32 %v596, %v597
    %v599 = vrot.slane %v598, 2
    %v600 = vadd.f32 %v598, %v599
    %v601 = vrot.slane %v600, 1
    %v602 = vadd.f32 %v600, %v601
    %v603 = vsel %vm77, %v509, 0.0
    %v604 = vrot.slane %v603, 4
    %v605 = vadd.f32 %v603, %v604
    %v606 = vrot.slane %v605, 2
    %v607 = vadd.f32 %v605, %v606
    %v608 = vrot.slane %v607, 1
    %v609 = vadd.f32 %v607, %v608
    %v610 = vsel %vm77, %v510, 0.0
    %v611 = vrot.slane %v610, 4
    %v612 = vadd.f32 %v610, %v611
    %v613 = vrot.slane %v612, 2
    %v614 = vadd.f32 %v612, %v613
    %v615 = vrot.slane %v614, 1
    %v616 = vadd.f32 %v614, %v615
    %v617 = vsel %vm77, %v511, 0.0
    %v618 = vrot.slane %v617, 4
    %v619 = vadd.f32 %v617, %v618
    %v620 = vrot.slane %v619, 2
    %v621 = vadd.f32 %v619, %v620
    %v622 = vrot.slane %v621, 1
    %v623 = vadd.f32 %v621, %v622
    %v624 = vld [vmem:[#allocation7] sm:$0xff]
    %v625 = vld [vmem:[#allocation7 + $0x8] sm:$0xff]
    %v627 = vsel %vm77, %v624, 0
    %v630 = vsel %vm77, %v625, 0
    %632 = vmatprep.subr.mxu0 0.0
    %633 = vmatpush1.xpose.msra.mxu0 %v627
    %634 = vmatprep.subr.mxu0 0.0
    %635 = vmatpush1.xpose.msra.mxu0 %v630
    %636 = vmatprep.subr.mxu0 0.0
    %637 = vmatpush1.xpose.msra.mxu0 0.0
    %638 = vmatprep.subr.mxu0 0.0
    %639 = vmatpush1.xpose.msra.mxu0 0.0
    %640 = vmatprep.subr.mxu0 0.0
    %641 = vmatpush1.xpose.msra.mxu0 0.0
    %642 = vmatprep.subr.mxu0 0.0
    %643 = vmatpush1.xpose.msra.mxu0 0.0
    %644 = vmatprep.subr.mxu0 0.0
    %645 = vmatpush1.xpose.msra.mxu0 0.0
    %646 = vmatprep.subr.mxu0 0.0
    %647 = vmatpush1.xpose.msra.mxu0 0.0
    %648 = vmatprep.subr.mxu0 0.0
    %649 = vmatpush1.xpose.msra.mxu0 0.0
    %650 = vmatprep.subr.mxu0 0.0
    %651 = vmatpush1.xpose.msra.mxu0 0.0
    %652 = vmatprep.subr.mxu0 0.0
    %653 = vmatpush1.xpose.msra.mxu0 0.0
    %654 = vmatprep.subr.mxu0 0.0
    %655 = vmatpush1.xpose.msra.mxu0 0.0
    %656 = vmatprep.subr.mxu0 0.0
    %657 = vmatpush1.xpose.msra.mxu0 0.0
    %658 = vmatprep.subr.mxu0 0.0
    %659 = vmatpush1.xpose.msra.mxu0 0.0
    %660 = vmatprep.subr.mxu0 0.0
    %661 = vmatpush1.xpose.msra.mxu0 0.0
    %662 = vmatprep.subr.mxu0 0.0
    %663 = vmatpush1.xpose.msra.mxu0 0.0
    %664 = vmatprep.subr.mxu0 0.0
    %665 = vmatpush1.xpose.msra.mxu0 0.0
    %666 = vmatprep.subr.mxu0 0.0
    %667 = vmatpush1.xpose.msra.mxu0 0.0
    %668 = vmatprep.subr.mxu0 0.0
    %669 = vmatpush1.xpose.msra.mxu0 0.0
    %670 = vmatprep.subr.mxu0 0.0
    %671 = vmatpush1.xpose.msra.mxu0 0.0
    %672 = vmatprep.subr.mxu0 0.0
    %673 = vmatpush1.xpose.msra.mxu0 0.0
    %674 = vmatprep.subr.mxu0 0.0
    %675 = vmatpush1.xpose.msra.mxu0 0.0
    %676 = vmatprep.subr.mxu0 0.0
    %677 = vmatpush1.xpose.msra.mxu0 0.0
    %678 = vmatprep.subr.mxu0 0.0
    %679 = vmatpush1.xpose.msra.mxu0 0.0
    %680 = vmatprep.subr.mxu0 0.0
    %681 = vmatpush1.xpose.msra.mxu0 0.0
    %682 = vmatprep.subr.mxu0 0.0
    %683 = vmatpush1.xpose.msra.mxu0 0.0
    %684 = vmatprep.subr.mxu0 0.0
    %685 = vmatpush1.xpose.msra.mxu0 0.0
    %686 = vmatprep.subr.mxu0 0.0
    %687 = vmatpush1.xpose.msra.mxu0 0.0
    %688 = vmatprep.subr.mxu0 0.0
    %689 = vmatpush1.xpose.msra.mxu0 0.0
    %690 = vmatprep.subr.mxu0 0.0
    %691 = vmatpush1.xpose.msra.mxu0 0.0
    %692 = vmatprep.subr.mxu0 0.0
    %693 = vmatpush1.xpose.msra.mxu0 0.0
    %694 = vmatprep.subr.mxu0 0.0
    %695 = vmatpush1.xpose.msra.mxu0 0.0
    %696 = vmatprep.mubr.f32.mxu0 0.0
    %697 = vmatmul.mubr.f32.gmra.mrb[0].mxu0 %v79
    %v698 = vpop.f32.mrb[0].mxu0
    %v699 = vadd.f32 0.0, %v698
    %v700 = vpop.f32.mrb[0].mxu0
    %701 = vdwg.mxu0
    %702 = vmatprep.subr.mxu0 0.0
    %703 = vmatpush1.xpose.msra.mxu0 %v627
    %704 = vmatprep.subr.mxu0 0.0
    %705 = vmatpush1.xpose.msra.mxu0 %v630
    %706 = vmatprep.subr.mxu0 0.0
    %707 = vmatpush1.xpose.msra.mxu0 0.0
    %708 = vmatprep.subr.mxu0 0.0
    %709 = vmatpush1.xpose.msra.mxu0 0.0
    %710 = vmatprep.subr.mxu0 0.0
    %711 = vmatpush1.xpose.msra.mxu0 0.0
    %712 = vmatprep.subr.mxu0 0.0
    %713 = vmatpush1.xpose.msra.mxu0 0.0
    %714 = vmatprep.subr.mxu0 0.0
    %715 = vmatpush1.xpose.msra.mxu0 0.0
    %716 = vmatprep.subr.mxu0 0.0
    %717 = vmatpush1.xpose.msra.mxu0 0.0
    %718 = vmatprep.subr.mxu0 0.0
    %719 = vmatpush1.xpose.msra.mxu0 0.0
    %720 = vmatprep.subr.mxu0 0.0
    %721 = vmatpush1.xpose.msra.mxu0 0.0
    %722 = vmatprep.subr.mxu0 0.0
    %723 = vmatpush1.xpose.msra.mxu0 0.0
    %724 = vmatprep.subr.mxu0 0.0
    %725 = vmatpush1.xpose.msra.mxu0 0.0
    %726 = vmatprep.subr.mxu0 0.0
    %727 = vmatpush1.xpose.msra.mxu0 0.0
    %728 = vmatprep.subr.mxu0 0.0
    %729 = vmatpush1.xpose.msra.mxu0 0.0
    %730 = vmatprep.subr.mxu0 0.0
    %731 = vmatpush1.xpose.msra.mxu0 0.0
    %732 = vmatprep.subr.mxu0 0.0
    %733 = vmatpush1.xpose.msra.mxu0 0.0
    %734 = vmatprep.subr.mxu0 0.0
    %735 = vmatpush1.xpose.msra.mxu0 0.0
    %736 = vmatprep.subr.mxu0 0.0
    %737 = vmatpush1.xpose.msra.mxu0 0.0
    %738 = vmatprep.subr.mxu0 0.0
    %739 = vmatpush1.xpose.msra.mxu0 0.0
    %740 = vmatprep.subr.mxu0 0.0
    %741 = vmatpush1.xpose.msra.mxu0 0.0
    %742 = vmatprep.subr.mxu0 0.0
    %743 = vmatpush1.xpose.msra.mxu0 0.0
    %744 = vmatprep.subr.mxu0 0.0
    %745 = vmatpush1.xpose.msra.mxu0 0.0
    %746 = vmatprep.subr.mxu0 0.0
    %747 = vmatpush1.xpose.msra.mxu0 0.0
    %748 = vmatprep.subr.mxu0 0.0
    %749 = vmatpush1.xpose.msra.mxu0 0.0
    %750 = vmatprep.subr.mxu0 0.0
    %751 = vmatpush1.xpose.msra.mxu0 0.0
    %752 = vmatprep.subr.mxu0 0.0
    %753 = vmatpush1.xpose.msra.mxu0 0.0
    %754 = vmatprep.subr.mxu0 0.0
    %755 = vmatpush1.xpose.msra.mxu0 0.0
    %756 = vmatprep.subr.mxu0 0.0
    %757 = vmatpush1.xpose.msra.mxu0 0.0
    %758 = vmatprep.subr.mxu0 0.0
    %759 = vmatpush1.xpose.msra.mxu0 0.0
    %760 = vmatprep.subr.mxu0 0.0
    %761 = vmatpush1.xpose.msra.mxu0 0.0
    %762 = vmatprep.subr.mxu0 0.0
    %763 = vmatpush1.xpose.msra.mxu0 0.0
    %764 = vmatprep.subr.mxu0 0.0
    %765 = vmatpush1.xpose.msra.mxu0 0.0
    %766 = vmatprep.mubr.f32.mxu0 0.0
    %767 = vmatmul.mubr.f32.gmra.mrb[0].mxu0 %v158
    %v768 = vpop.f32.mrb[0].mxu0
    %v769 = vadd.f32 0.0, %v768
    %v770 = vpop.f32.mrb[0].mxu0
    %771 = vdwg.mxu0
    %v774 = vrot.slane %v699, 1
    %v775 = vrot.slane %v699, 2
    %v776 = vrot.slane %v699, 3
    %v777 = vrot.slane %v699, 4
    %v778 = vrot.slane %v699, 5
    %v779 = vrot.slane %v699, 6
    %v780 = vrot.slane %v699, 7
    %v781 = vrot.slane %v769, 1
    %v782 = vrot.slane %v769, 2
    %v783 = vrot.slane %v769, 3
    %v784 = vrot.slane %v769, 4
    %v785 = vrot.slane %v769, 5
    %v786 = vrot.slane %v769, 6
    %v787 = vrot.slane %v769, 7
    %v804 = vadd.f32 %v518, %v699
    %v805 = vadd.f32 %v525, %v774
    %v806 = vadd.f32 %v532, %v775
    %v807 = vadd.f32 %v539, %v776
    %v808 = vadd.f32 %v546, %v777
    %v809 = vadd.f32 %v553, %v778
    %v810 = vadd.f32 %v560, %v779
    %v811 = vadd.f32 %v567, %v780
    %v812 = vadd.f32 %v574, %v769
    %v813 = vadd.f32 %v581, %v781
    %v814 = vadd.f32 %v588, %v782
    %v815 = vadd.f32 %v595, %v783
    %v816 = vadd.f32 %v602, %v784
    %v817 = vadd.f32 %v609, %v785
    %v818 = vadd.f32 %v616, %v786
    %v819 = vadd.f32 %v623, %v787
    %v836 = vrot.slane %v805, 7
    %vm837 = vcmask 1041409
    %v838 = vsel %vm837, %v836, %v804
    %v839 = vrot.slane %v806, 6
    %vm840 = vcmask 1042434
    %v841 = vsel %vm840, %v839, %v838
    %v842 = vrot.slane %v807, 5
    %vm843 = vcmask 1043459
    %v844 = vsel %vm843, %v842, %v841
    %v845 = vrot.slane %v808, 4
    %vm846 = vcmask 1044484
    %v847 = vsel %vm846, %v845, %v844
    %v848 = vrot.slane %v809, 3
    %vm849 = vcmask 1045509
    %v850 = vsel %vm849, %v848, %v847
    %v851 = vrot.slane %v810, 2
    %vm852 = vcmask 1046534
    %v853 = vsel %vm852, %v851, %v850
    %v854 = vrot.slane %v811, 1
    %vm855 = vcmask 1047559
    %v856 = vsel %vm855, %v854, %v853
    %v857 = vrot.slane %v813, 7
    %v858 = vsel %vm837, %v857, %v812
    %v859 = vrot.slane %v814, 6
    %v860 = vsel %vm840, %v859, %v858
    %v861 = vrot.slane %v815, 5
    %v862 = vsel %vm843, %v861, %v860
    %v863 = vrot.slane %v816, 4
    %v864 = vsel %vm846, %v863, %v862
    %v865 = vrot.slane %v817, 3
    %v866 = vsel %vm849, %v865, %v864
    %v867 = vrot.slane %v818, 2
    %v868 = vsel %vm852, %v867, %v866
    %v869 = vrot.slane %v819, 1
    %v870 = vsel %vm855, %v869, %v868
    %873 = vst.msk [vmem:[#allocation10] sm:$0xff] %vm77, %v856
    %874 = vst.msk [vmem:[#allocation10 + $0x8] sm:$0xff] %vm77, %v870
    // Predicated region
    $region34: #{tpu_custom_call.1} parent=1 // pred_check
      _
    $region35: #{tpu_custom_call.1} parent=1 // pred_check_branch
      %876 = sbr.rel (0) target = $region37
    $region36: #{tpu_custom_call.1} parent=1 // pred_region
      %s878 = ssub.s32 256, 256
      %879 = vsyncadd [#allocation4], %s878
      %s880 = sshll.u32 [#allocation10], 4
      %s881 = int_to_ptr.vmem [resolvable:$true] %s880
      %886 = dma.vmem_to_hbm [thread:$0]  %s881, 256, %s4, [#allocation4], 128, 128, 8
    $region37: #{tpu_custom_call.1} parent=1 // pred_fallthru
      _
    // Predicated region
    $region38: #{tpu_custom_call.1} parent=1 // pred_check
      _
    $region39: #{tpu_custom_call.1} parent=1 // pred_check_branch
      %888 = sbr.rel (0) target = $region41
    $region40: #{tpu_custom_call.1} parent=1 // pred_region
      %889 = dma.done [#allocation4], 256
    $region41: #{tpu_custom_call.1} parent=1 // pred_fallthru
      _
    %890 = vsyncpa [#allocation3], 1
    %891 = vsyncpa [#allocation6], 1
    %892 = vsyncpa [#allocation9], 1
    %893 = vsyncpa [#allocation4], 1

</llo_original>
